<compile_context>
chip_gen: v7x
topology: tpu7x:2x2x1
jax: 0.10.0
libtpu: 0.0.40
codegen_flags: <defaults>
</compile_context>

<pallas_src>
import functools

import jax
import jax.numpy as jnp
import numpy as np
from jax.experimental import pallas as pl
from jax.experimental.pallas import tpu as pltpu


_EPS = 1e-9


def _masked_softmax(attn, mask):
    # Mirrors torch masked_softmax: masked logits are forced to 0 (so they
    # contribute exp(0)=1 to the denominator), then normalized.
    attn = jnp.where(mask, 0.0, attn)
    e = jnp.exp(attn)
    denom = jnp.sum(e, axis=1, keepdims=True) + _EPS
    return e / denom


# ----------------------------------------------------------------------------
# Kernels — one grid step processes a batch tile of TB rows.
# ----------------------------------------------------------------------------
def _mean_kernel(uid_ref, seq_ref, wvt_ref, out_ref, *, gamma):
    uid = uid_ref[...]                                    # (TB, D)
    seq = seq_ref[...]                                    # (TB, S, D)
    wvt = wvt_ref[...]                                    # (D, D) = W_v.T
    nz = (jnp.sum(seq, axis=-1) != 0.0).astype(jnp.float32)        # (TB, S)
    denom = jnp.sum(nz, axis=-1, keepdims=True) + _EPS             # (TB, 1)
    mean = jnp.sum(seq, axis=1) / denom                            # (TB, D)
    out = jnp.dot(mean, wvt, preferred_element_type=jnp.float32)
    # NOTE: D < 128 -> stores are lane-masked; D is fixed by the model so we
    # keep sublane density maximal with the full (TB, D) tile.
    out_ref[...] = gamma * uid + (1.0 - gamma) * out


def _attention_core(uid, seq, wvt, wkt, bk, score_fn, gamma):
    tb, s, d = seq.shape
    # Flattened key projection: one (TB*S, D) @ (D, D) MXU matmul instead of
    # TB tiny batched matmuls (weight stays staged across the whole tile).
    seq2d = seq.reshape(tb * s, d)
    key2d = jnp.tanh(
        jnp.dot(seq2d, wkt, preferred_element_type=jnp.float32) + bk)
    key = key2d.reshape(tb, s, d)                         # (TB, S, D)

    mask = jnp.sum(seq, axis=-1) == 0.0                   # (TB, S)
    attn = _masked_softmax(score_fn(key), mask)           # (TB, S)
    # TODO(synk): attention dropout omitted (dropout_rate=0 in the module).
    output = jnp.sum(attn[:, :, None] * seq, axis=1)      # (TB, D)
    out = jnp.dot(output, wvt, preferred_element_type=jnp.float32)
    return gamma * uid + (1.0 - gamma) * out


def _user_attention_kernel(uid_ref, seq_ref, wvt_ref, wkt_ref, bk_ref,
                           out_ref, *, gamma):
    uid = uid_ref[...]                                    # (TB, D)
    out_ref[...] = _attention_core(
        uid, seq_ref[...], wvt_ref[...], wkt_ref[...], bk_ref[...],
        lambda key: jnp.sum(key * uid[:, None, :], axis=-1),
        gamma)


def _self_attention_kernel(uid_ref, seq_ref, wvt_ref, wkt_ref, bk_ref,
                           wqt_ref, out_ref, *, gamma):
    wqt = wqt_ref[...]                                    # (1, D) = W_q.T
    out_ref[...] = _attention_core(
        uid_ref[...], seq_ref[...], wvt_ref[...], wkt_ref[...], bk_ref[...],
        lambda key: jnp.sum(key * wqt[:, None, :], axis=-1),
        gamma)


# ----------------------------------------------------------------------------
# Wrapper
# ----------------------------------------------------------------------------
def _choose_batch_tile(b, s, d, itemsize=4, max_tile=512, budget=8 << 20):
    """Batch tile (multiple of 8) that keeps the double-buffered seq tile
    within ~8 MiB and minimizes padding waste (well under v7x's 64 MiB)."""
    per_row = 2 * s * d * itemsize          # double-buffered bytes / batch row
    cap = (budget // max(per_row, 1)) // 8 * 8
    cap = max(8, min(max_tile, cap))
    b_pad8 = ((b + 7) // 8) * 8
    if b_pad8 <= cap:
        return b_pad8
    steps = -(-b_pad8 // cap)               # ceil-div: number of grid steps
    tb = -(-b_pad8 // steps)
    return ((tb + 7) // 8) * 8


def behavior_aggregator(uid_emb, sequence_emb, params, *, aggregator='mean',
                        gamma=0.5):
    """Pallas implementation of BehaviorAggregator.forward.

    uid_emb:       (B, D) float32
    sequence_emb:  (B, S, D) float32
    params: dict with 'W_v' (D,D); for attention variants also 'W_k' (D,D),
            'b_k' (1,D); for self_attention also 'W_q' (D,1).
    """
    B, D = uid_emb.shape
    _, S, _ = sequence_emb.shape

    if aggregator not in ('mean', 'user_attention', 'self_attention'):
        # gamma*uid + (1-gamma)*uid == uid
        return uid_emb

    uid_emb = uid_emb.astype(jnp.float32)
    sequence_emb = sequence_emb.astype(jnp.float32)

    tb = _choose_batch_tile(B, S, D)
    grid_b = pl.cdiv(B, tb)
    b_pad = grid_b * tb
    if b_pad != B:
        uid_p = jnp.pad(uid_emb, ((0, b_pad - B), (0, 0)))
        seq_p = jnp.pad(sequence_emb, ((0, b_pad - B), (0, 0), (0, 0)))
    else:
        uid_p, seq_p = uid_emb, sequence_emb

    # Pre-transposed weights: kernels compute x @ W.T as x @ W_T directly
    # (no per-iteration in-kernel transpose / XLU traffic).
    wv_t = jnp.asarray(params['W_v'], jnp.float32).T              # (D, D)

    uid_spec = pl.BlockSpec((tb, D), lambda i: (i, 0))
    seq_spec = pl.BlockSpec((tb, S, D), lambda i: (i, 0, 0))
    w2_spec = pl.BlockSpec((D, D), lambda i: (0, 0))              # resident
    bk_spec = pl.BlockSpec((1, D), lambda i: (0, 0))              # resident
    out_spec = pl.BlockSpec((tb, D), lambda i: (i, 0))

    if aggregator == 'mean':
        kernel = functools.partial(_mean_kernel, gamma=gamma)
        args = (uid_p, seq_p, wv_t)
        in_specs = [uid_spec, seq_spec, w2_spec]
    elif aggregator == 'user_attention':
        wk_t = jnp.asarray(params['W_k'], jnp.float32).T          # (D, D)
        bk = jnp.asarray(params['b_k'], jnp.float32).reshape(1, D)
        kernel = functools.partial(_user_attention_kernel, gamma=gamma)
        args = (uid_p, seq_p, wv_t, wk_t, bk)
        in_specs = [uid_spec, seq_spec, w2_spec, w2_spec, bk_spec]
    else:  # self_attention
        wk_t = jnp.asarray(params['W_k'], jnp.float32).T          # (D, D)
        bk = jnp.asarray(params['b_k'], jnp.float32).reshape(1, D)
        wq_t = jnp.asarray(params['W_q'], jnp.float32).reshape(D, 1).T  # (1,D)
        kernel = functools.partial(_self_attention_kernel, gamma=gamma)
        args = (uid_p, seq_p, wv_t, wk_t, bk, wq_t)
        in_specs = [uid_spec, seq_spec, w2_spec, w2_spec, bk_spec, bk_spec]

    out = pl.pallas_call(
        kernel,
        out_shape=jax.ShapeDtypeStruct((b_pad, D), jnp.float32),
        grid=(grid_b,),
        in_specs=in_specs,
        out_specs=out_spec,
        compiler_params=pltpu.CompilerParams(
            dimension_semantics=("parallel",)),
    )(*args)
    return out[:B] if b_pad != B else out


# ----------------------------------------------------------------------------
# Pure-JAX reference (mirrors the torch code) for sanity checking.
# Runs at highest matmul precision so the baseline itself is f32-accurate.
# ----------------------------------------------------------------------------
def _reference(uid_emb, seq, params, aggregator, gamma):
    def masked_softmax(x, mask):
        x = jnp.where(mask, 0.0, x)
        e = jnp.exp(x)
        return e / (jnp.sum(e, axis=1, keepdims=True) + _EPS)

    with jax.default_matmul_precision('highest'):
        if aggregator == 'mean':
            nz = (jnp.sum(seq, axis=-1) != 0.0).astype(jnp.float32)
            mean = jnp.sum(seq, axis=1) / (jnp.sum(nz, -1, keepdims=True) + _EPS)
            out = mean @ params['W_v'].T
        else:
            key = jnp.tanh(seq @ params['W_k'].T + params['b_k'][0])
            mask = jnp.sum(seq, axis=-1) == 0.0
            if aggregator == 'user_attention':
                attn = jnp.einsum('bse,be->bs', key, uid_emb)
            else:
                attn = (key @ params['W_q'])[..., 0]
            attn = masked_softmax(attn, mask)
            output = jnp.einsum('bs,bsd->bd', attn, seq)
            out = output @ params['W_v'].T
        return gamma * uid_emb + (1.0 - gamma) * out


# ----------------------------------------------------------------------------
# Main
# ----------------------------------------------------------------------------
if __name__ == "__main__":
    gamma = 0.5
    S, D = 8, 32

    key = jax.random.PRNGKey(0)
    k_wv, k_wk, k_bk, k_wq, k_data = jax.random.split(key, 5)

    params = {
        'W_v': jax.random.normal(k_wv, (D, D), dtype=jnp.float32) * 0.1,
        'W_k': jax.random.normal(k_wk, (D, D), dtype=jnp.float32) * 0.1,
        'b_k': jax.random.normal(k_bk, (1, D), dtype=jnp.float32) * 0.1,
        'W_q': jax.random.normal(k_wq, (D, 1), dtype=jnp.float32) * 0.1,
    }

    # Small config (matches the module defaults) + a larger batch that
    # exercises the batch-tiled grid and remainder padding.
    for B in (2, 1030):
        k_uid, k_seq, k_data = jax.random.split(k_data, 3)
        uid_emb = jax.random.normal(k_uid, (B, D), dtype=jnp.float32)
        sequence_emb = jax.random.normal(k_seq, (B, S, D), dtype=jnp.float32)
        # Zero-pad some timesteps so the mask path is exercised.
        sequence_emb = sequence_emb.at[0, -2:, :].set(0.0)

        for agg in ('mean', 'user_attention', 'self_attention'):
            out = behavior_aggregator(uid_emb, sequence_emb, params,
                                      aggregator=agg, gamma=gamma)
            out = jax.block_until_ready(out)
            ref = _reference(uid_emb, sequence_emb, params, agg, gamma)
            # Small margin for MXU multi-pass f32 rounding / EUP exp-tanh ULPs.
            np.testing.assert_allclose(np.asarray(out), np.asarray(ref),
                                       rtol=2e-3, atol=2e-3)

    print("KERNEL_OK")
</pallas_src>

<mosaic_0001>
module attributes {stable_mosaic.version = 11 : i64} {
  func.func @_mean_kernel(%arg0: i32, %arg1: memref<8x32xf32, #tpu.memory_space<vmem>>, %arg2: memref<8x8x32xf32, #tpu.memory_space<vmem>>, %arg3: memref<32x32xf32, #tpu.memory_space<vmem>>, %arg4: memref<8x32xf32, #tpu.memory_space<vmem>>) attributes {dimension_semantics = [#tpu.dimension_semantics<parallel>], iteration_bounds = array<i64: 1>, scalar_prefetch = 0 : i64, scratch_operands = 0 : i64, tpu.core_type = #tpu.core_type<tc>, window_params = [{transform_indices = @transform_0, window_bounds = array<i64: 8, 32>}, {transform_indices = @transform_1, window_bounds = array<i64: 8, 8, 32>}, {pipeline_mode = #tpu.pipeline_mode<synchronous>, transform_indices = @transform_2, window_bounds = array<i64: 32, 32>}, {transform_indices = @transform_3, window_bounds = array<i64: 8, 32>}]} {
    %c0 = arith.constant 0 : index
    %c0_0 = arith.constant 0 : index
    %0 = vector.load %arg1[%c0, %c0_0] : memref<8x32xf32, #tpu.memory_space<vmem>>, vector<8x32xf32>
    %c0_1 = arith.constant 0 : index
    %c0_2 = arith.constant 0 : index
    %c0_3 = arith.constant 0 : index
    %1 = vector.load %arg2[%c0_1, %c0_2, %c0_3] : memref<8x8x32xf32, #tpu.memory_space<vmem>>, vector<8x8x32xf32>
    %c0_4 = arith.constant 0 : index
    %c0_5 = arith.constant 0 : index
    %2 = vector.load %arg3[%c0_4, %c0_5] : memref<32x32xf32, #tpu.memory_space<vmem>>, vector<32x32xf32>
    %cst = arith.constant dense<0.000000e+00> : vector<8x8xf32>
    %3 = vector.multi_reduction <add>, %1, %cst [2] : vector<8x8x32xf32> to vector<8x8xf32>
    %cst_6 = arith.constant 0.000000e+00 : f32
    %4 = vector.broadcast %cst_6 : f32 to vector<8x8xf32>
    %5 = arith.cmpf one, %3, %4 : vector<8x8xf32>
    %6 = arith.extui %5 : vector<8x8xi1> to vector<8x8xi32>
    %7 = arith.sitofp %6 : vector<8x8xi32> to vector<8x8xf32>
    %cst_7 = arith.constant dense<0.000000e+00> : vector<8xf32>
    %8 = vector.multi_reduction <add>, %7, %cst_7 [1] : vector<8x8xf32> to vector<8xf32>
    %9 = vector.shape_cast %8 : vector<8xf32> to vector<8x1xf32>
    %cst_8 = arith.constant 9.99999971E-10 : f32
    %10 = vector.broadcast %cst_8 : f32 to vector<8x1xf32>
    %11 = arith.addf %9, %10 : vector<8x1xf32>
    %cst_9 = arith.constant dense<0.000000e+00> : vector<8x32xf32>
    %12 = vector.multi_reduction <add>, %1, %cst_9 [1] : vector<8x8x32xf32> to vector<8x32xf32>
    %13 = vector.broadcast %11 : vector<8x1xf32> to vector<8x32xf32>
    %14 = arith.divf %12, %13 : vector<8x32xf32>
    %cst_10 = arith.constant dense<0.000000e+00> : vector<8x32xf32>
    %15 = tpu.matmul %14, %2, %cst_10 {dimension_numbers = #tpu.dot_dimension_numbers<[1], [0], [0], [1], [0, 0, 1, 1], [], []>} : vector<8x32xf32>, vector<32x32xf32>, vector<8x32xf32> -> vector<8x32xf32>
    %cst_11 = arith.constant 5.000000e-01 : f32
    %16 = vector.broadcast %cst_11 : f32 to vector<8x32xf32>
    %17 = arith.mulf %16, %0 : vector<8x32xf32>
    %cst_12 = arith.constant 5.000000e-01 : f32
    %18 = vector.broadcast %cst_12 : f32 to vector<8x32xf32>
    %19 = arith.mulf %18, %15 : vector<8x32xf32>
    %20 = arith.addf %17, %19 : vector<8x32xf32>
    %c0_13 = arith.constant 0 : index
    %c0_14 = arith.constant 0 : index
    %21 = vector.load %arg4[%c0_13, %c0_14] : memref<8x32xf32, #tpu.memory_space<vmem>>, vector<8x32xf32>
    tpu.vector_store %arg4[%c0_13, %c0_14], %20 {strides = array<i32>} : memref<8x32xf32, #tpu.memory_space<vmem>>, vector<8x32xf32>,
    return
  }
  func.func @transform_0(%arg0: i32) -> (i32, i32) {
    %c0_i32 = arith.constant 0 : i32
    %c0_i32_0 = arith.constant 0 : i32
    return %arg0, %c0_i32 : i32, i32
  }
  func.func @transform_1(%arg0: i32) -> (i32, i32, i32) {
    %c0_i32 = arith.constant 0 : i32
    %c0_i32_0 = arith.constant 0 : i32
    %c0_i32_1 = arith.constant 0 : i32
    return %arg0, %c0_i32, %c0_i32_0 : i32, i32, i32
  }
  func.func @transform_2(%arg0: i32) -> (i32, i32) {
    %c0_i32 = arith.constant 0 : i32
    %c0_i32_0 = arith.constant 0 : i32
    %c0_i32_1 = arith.constant 0 : i32
    return %c0_i32, %c0_i32_0 : i32, i32
  }
  func.func @transform_3(%arg0: i32) -> (i32, i32) {
    %c0_i32 = arith.constant 0 : i32
    %c0_i32_0 = arith.constant 0 : i32
    return %arg0, %c0_i32 : i32, i32
  }
}

</mosaic_0001>

<llo_original>
// kernel: tpu_custom_call.1
$region0: #{tpu_custom_call.1}
  #allocation0 [shape = 'u32[]', space=smem, size = 0x4, offset = 0x4, fixed_abs, tag = 'smem constant byte address 0x4 - core index']
  #allocation1 [shape = 'u32[144,128]{1,0:T(1,128)}', space=vmem, size = 0x12000, scoped, tag = 'internal scratch']
  %s0 = inlined_call_operand.hbm [shape: f32[8,32], index: 0, kind: input, shape index: {}]
  %s1 = inlined_call_operand.hbm [shape: f32[8,8,32], index: 1, kind: input, shape index: {}]
  %s2 = inlined_call_operand.hbm [shape: f32[32,32], index: 2, kind: input, shape index: {}]
  %s3 = inlined_call_operand.hbm [shape: f32[8,32], index: 3, kind: output, shape index: {}]
  %s4 = sld [smem:[#allocation0]]
  $region34: #{tpu_custom_call.1} parent=0
    _
  %s6 = ssub.s32 1, %s4
  %s7 = scalar_select 0, %s6, %s4
  $region1: #{tpu_custom_call.1} parent=0
    #allocation2 [shape = 'u8[4096]{0}', space=vmem, size = 0x1000, scoped, tag = 'input window, operand 0, single buffered']
    #allocation3 [shape = 's32[1]{0}', space=sflag, size = 0x4, scoped, tag = 'scoped memory for tpu_custom_call.1']
    #allocation4 [shape = 's32[1]{0}', space=sflag, size = 0x4, scoped, tag = 'scoped memory for tpu_custom_call.1']
    #allocation5 [shape = 'u8[32768]{0}', space=vmem, size = 0x8000, scoped, tag = 'input window, operand 1, single buffered']
    #allocation6 [shape = 's32[1]{0}', space=sflag, size = 0x4, scoped, tag = 'scoped memory for tpu_custom_call.1']
    #allocation7 [shape = 'u8[16384]{0}', space=vmem, size = 0x4000, scoped, tag = 'input window, operand 2, single buffered']
    #allocation8 [shape = 'u8[4096]{0}', space=vmem, size = 0x1000, scoped, tag = 'output window, operand 0, single buffered']
    %8 = vsyncpa [#allocation3], 0
    %9 = vsyncpa [#allocation6], 0
    %10 = vsyncpa [#allocation4], 0
    // Predicated region
    $region2: #{tpu_custom_call.1} parent=1 // pred_check
      _
    $region3: #{tpu_custom_call.1} parent=1 // pred_check_branch
      %12 = sbr.rel (0) target = $region5
    $region4: #{tpu_custom_call.1} parent=1 // pred_region
      %s14 = ssub.s32 128, 128
      %15 = vsyncadd [#allocation3], %s14
      %s17 = sshll.u32 [#allocation2], 4
      %s18 = int_to_ptr.vmem [resolvable:$true] %s17
      %20 = dma.hbm_to_vmem [thread:$0]  %s0, 128, %s18, [#allocation3]
    $region5: #{tpu_custom_call.1} parent=1 // pred_fallthru
      _
    // Predicated region
    $region6: #{tpu_custom_call.1} parent=1 // pred_check
      _
    $region7: #{tpu_custom_call.1} parent=1 // pred_check_branch
      %22 = sbr.rel (0) target = $region9
    $region8: #{tpu_custom_call.1} parent=1 // pred_region
      %s24 = ssub.s32 1024, 1024
      %25 = vsyncadd [#allocation6], %s24
      %s26 = sshll.u32 [#allocation5], 4
      %s27 = int_to_ptr.vmem [resolvable:$true] %s26
      %32 = dma.hbm_to_vmem [thread:$0]  %s1, 1024, %s27, [#allocation6], 128, 128, 8
    $region9: #{tpu_custom_call.1} parent=1 // pred_fallthru
      _
    // Predicated region
    $region10: #{tpu_custom_call.1} parent=1 // pred_check
      _
    $region11: #{tpu_custom_call.1} parent=1 // pred_check_branch
      %34 = sbr.rel (0) target = $region13
    $region12: #{tpu_custom_call.1} parent=1 // pred_region
      %s36 = ssub.s32 512, 512
      %37 = vsyncadd [#allocation6], %s36
      %s38 = sshll.u32 [#allocation7], 4
      %s39 = int_to_ptr.vmem [resolvable:$true] %s38
      %44 = dma.hbm_to_vmem [thread:$0]  %s2, 512, %s39, [#allocation6], 128, 128, 8
    $region13: #{tpu_custom_call.1} parent=1 // pred_fallthru
      _
    // Predicated region
    $region14: #{tpu_custom_call.1} parent=1 // pred_check
      _
    $region15: #{tpu_custom_call.1} parent=1 // pred_check_branch
      %46 = sbr.rel (0) target = $region17
    $region16: #{tpu_custom_call.1} parent=1 // pred_region
      %47 = dma.done [#allocation3], 128
    $region17: #{tpu_custom_call.1} parent=1 // pred_fallthru
      _
    // Predicated region
    $region18: #{tpu_custom_call.1} parent=1 // pred_check
      _
    $region19: #{tpu_custom_call.1} parent=1 // pred_check_branch
      %49 = sbr.rel (0) target = $region21
    $region20: #{tpu_custom_call.1} parent=1 // pred_region
      %50 = dma.done [#allocation6], 1024
    $region21: #{tpu_custom_call.1} parent=1 // pred_fallthru
      _
    // Predicated region
    $region22: #{tpu_custom_call.1} parent=1 // pred_check
      _
    $region23: #{tpu_custom_call.1} parent=1 // pred_check_branch
      %52 = sbr.rel (0) target = $region25
    $region24: #{tpu_custom_call.1} parent=1 // pred_region
      %53 = dma.done [#allocation6], 512
    $region25: #{tpu_custom_call.1} parent=1 // pred_fallthru
      _
    %v54 = vld [vmem:[#allocation2] sm:$0xff]
    %v55 = vld [vmem:[#allocation5] sm:$0xff]
    %v56 = vld [vmem:[#allocation5 + $0x8] sm:$0xff]
    %v57 = vld [vmem:[#allocation5 + $0x10] sm:$0xff]
    %v58 = vld [vmem:[#allocation5 + $0x18] sm:$0xff]
    %v59 = vld [vmem:[#allocation5 + $0x20] sm:$0xff]
    %v60 = vld [vmem:[#allocation5 + $0x28] sm:$0xff]
    %v61 = vld [vmem:[#allocation5 + $0x30] sm:$0xff]
    %v62 = vld [vmem:[#allocation5 + $0x38] sm:$0xff]
    %v63 = vld [vmem:[#allocation7] sm:$0xff]
    %v64 = vld [vmem:[#allocation7 + $0x8] sm:$0xff]
    %v65 = vld [vmem:[#allocation7 + $0x10] sm:$0xff]
    %v66 = vld [vmem:[#allocation7 + $0x18] sm:$0xff]
    %vm67 = vcmask 261120
    %v68 = vsel %vm67, %v55, 0.0
    %69 = vadd.xlane.f32.xlu0 %v68
    %v70 = vpop.xlane.xlu0 %69
    %v71 = vsel %vm67, %v56, 0.0
    %72 = vadd.xlane.f32.xlu0 %v71
    %v73 = vpop.xlane.xlu0 %72
    %v74 = vsel %vm67, %v57, 0.0
    %75 = vadd.xlane.f32.xlu0 %v74
    %v76 = vpop.xlane.xlu0 %75
    %v77 = vsel %vm67, %v58, 0.0
    %78 = vadd.xlane.f32.xlu0 %v77
    %v79 = vpop.xlane.xlu0 %78
    %v80 = vsel %vm67, %v59, 0.0
    %81 = vadd.xlane.f32.xlu0 %v80
    %v82 = vpop.xlane.xlu0 %81
    %v83 = vsel %vm67, %v60, 0.0
    %84 = vadd.xlane.f32.xlu0 %v83
    %v85 = vpop.xlane.xlu0 %84
    %v86 = vsel %vm67, %v61, 0.0
    %87 = vadd.xlane.f32.xlu0 %v86
    %v88 = vpop.xlane.xlu0 %87
    %v89 = vsel %vm67, %v62, 0.0
    %90 = vadd.xlane.f32.xlu0 %v89
    %v91 = vpop.xlane.xlu0 %90
    %vm92 = vcmp.ne.f32.partialorder %v70, 0.0
    %vm93 = vcmp.ne.f32.partialorder %v73, 0.0
    %vm94 = vcmp.ne.f32.partialorder %v76, 0.0
    %vm95 = vcmp.ne.f32.partialorder %v79, 0.0
    %vm96 = vcmp.ne.f32.partialorder %v82, 0.0
    %vm97 = vcmp.ne.f32.partialorder %v85, 0.0
    %vm98 = vcmp.ne.f32.partialorder %v88, 0.0
    %vm99 = vcmp.ne.f32.partialorder %v91, 0.0
    %v100 = vsel %vm92, 1, 0
    %v101 = vsel %vm93, 1, 0
    %v102 = vsel %vm94, 1, 0
    %v103 = vsel %vm95, 1, 0
    %v104 = vsel %vm96, 1, 0
    %v105 = vsel %vm97, 1, 0
    %v106 = vsel %vm98, 1, 0
    %v107 = vsel %vm99, 1, 0
    %v108 = vcvt.s32.f32 %v100
    %v109 = vcvt.s32.f32 %v101
    %v110 = vcvt.s32.f32 %v102
    %v111 = vcvt.s32.f32 %v103
    %v112 = vcvt.s32.f32 %v104
    %v113 = vcvt.s32.f32 %v105
    %v114 = vcvt.s32.f32 %v106
    %v115 = vcvt.s32.f32 %v107
    %v124 = vlaneseq
    %v125 = vand.u32 %v124, 127
    %v126 = vlaneseq
    %v127 = vshrl.u32 %v126, 7
    %v128 = vsub.s32 %v125, %v127
    %v129 = vrot.slane %v108, %v128
    %v130 = vlaneseq
    %v131 = vshrl.u32 %v130, 7
    %v132 = vsub.s32 %v125, %v131
    %v133 = vrot.slane %v109, %v132
    %v134 = vlaneseq
    %v135 = vshrl.u32 %v134, 7
    %v136 = vsub.s32 %v125, %v135
    %v137 = vrot.slane %v110, %v136
    %v138 = vlaneseq
    %v139 = vshrl.u32 %v138, 7
    %v140 = vsub.s32 %v125, %v139
    %v141 = vrot.slane %v111, %v140
    %v142 = vlaneseq
    %v143 = vshrl.u32 %v142, 7
    %v144 = vsub.s32 %v125, %v143
    %v145 = vrot.slane %v112, %v144
    %v146 = vlaneseq
    %v147 = vshrl.u32 %v146, 7
    %v148 = vsub.s32 %v125, %v147
    %v149 = vrot.slane %v113, %v148
    %v150 = vlaneseq
    %v151 = vshrl.u32 %v150, 7
    %v152 = vsub.s32 %v125, %v151
    %v153 = vrot.slane %v114, %v152
    %v154 = vlaneseq
    %v155 = vshrl.u32 %v154, 7
    %v156 = vsub.s32 %v125, %v155
    %v157 = vrot.slane %v115, %v156
    %vm158 = vcmask 1041409
    %v159 = vsel %vm158, %v133, %v129
    %vm160 = vcmask 1042434
    %v161 = vsel %vm160, %v137, %v159
    %vm162 = vcmask 1043459
    %v163 = vsel %vm162, %v141, %v161
    %vm164 = vcmask 1044484
    %v165 = vsel %vm164, %v145, %v163
    %vm166 = vcmask 1045509
    %v167 = vsel %vm166, %v149, %v165
    %vm168 = vcmask 1046534
    %v169 = vsel %vm168, %v153, %v167
    %vm170 = vcmask 1047559
    %v171 = vsel %vm170, %v157, %v169
    %vm173 = vcmask 64512
    %v174 = vsel %vm173, %v171, 0.0
    %175 = vadd.xlane.f32.xlu0 %v174
    %v176 = vpop.xlane.xlu0 %175
    %v177 = vadd.f32 %v176, 1e-09
    %v178 = vrot.slane %v68, 4
    %v179 = vadd.f32 %v68, %v178
    %v180 = vrot.slane %v179, 2
    %v181 = vadd.f32 %v179, %v180
    %v182 = vrot.slane %v181, 1
    %v183 = vadd.f32 %v181, %v182
    %v184 = vrot.slane %v71, 4
    %v185 = vadd.f32 %v71, %v184
    %v186 = vrot.slane %v185, 2
    %v187 = vadd.f32 %v185, %v186
    %v188 = vrot.slane %v187, 1
    %v189 = vadd.f32 %v187, %v188
    %v190 = vrot.slane %v74, 4
    %v191 = vadd.f32 %v74, %v190
    %v192 = vrot.slane %v191, 2
    %v193 = vadd.f32 %v191, %v192
    %v194 = vrot.slane %v193, 1
    %v195 = vadd.f32 %v193, %v194
    %v196 = vrot.slane %v77, 4
    %v197 = vadd.f32 %v77, %v196
    %v198 = vrot.slane %v197, 2
    %v199 = vadd.f32 %v197, %v198
    %v200 = vrot.slane %v199, 1
    %v201 = vadd.f32 %v199, %v200
    %v202 = vrot.slane %v80, 4
    %v203 = vadd.f32 %v80, %v202
    %v204 = vrot.slane %v203, 2
    %v205 = vadd.f32 %v203, %v204
    %v206 = vrot.slane %v205, 1
    %v207 = vadd.f32 %v205, %v206
    %v208 = vrot.slane %v83, 4
    %v209 = vadd.f32 %v83, %v208
    %v210 = vrot.slane %v209, 2
    %v211 = vadd.f32 %v209, %v210
    %v212 = vrot.slane %v211, 1
    %v213 = vadd.f32 %v211, %v212
    %v214 = vrot.slane %v86, 4
    %v215 = vadd.f32 %v86, %v214
    %v216 = vrot.slane %v215, 2
    %v217 = vadd.f32 %v215, %v216
    %v218 = vrot.slane %v217, 1
    %v219 = vadd.f32 %v217, %v218
    %v220 = vrot.slane %v89, 4
    %v221 = vadd.f32 %v89, %v220
    %v222 = vrot.slane %v221, 2
    %v223 = vadd.f32 %v221, %v222
    %v224 = vrot.slane %v223, 1
    %v225 = vadd.f32 %v223, %v224
    %v227 = vrot.slane %v177, 1
    %v228 = vrot.slane %v177, 2
    %v229 = vrot.slane %v177, 3
    %v230 = vrot.slane %v177, 4
    %v231 = vrot.slane %v177, 5
    %v232 = vrot.slane %v177, 6
    %v233 = vrot.slane %v177, 7
    %v242 = vrcp.pop %v177
    %v243 = vmul.f32 %v183, %v242
    %v244 = vrcp.pop %v227
    %v245 = vmul.f32 %v189, %v244
    %v246 = vrcp.pop %v228
    %v247 = vmul.f32 %v195, %v246
    %v248 = vrcp.pop %v229
    %v249 = vmul.f32 %v201, %v248
    %v250 = vrcp.pop %v230
    %v251 = vmul.f32 %v207, %v250
    %v252 = vrcp.pop %v231
    %v253 = vmul.f32 %v213, %v252
    %v254 = vrcp.pop %v232
    %v255 = vmul.f32 %v219, %v254
    %v256 = vrcp.pop %v233
    %v257 = vmul.f32 %v225, %v256
    %v266 = vrot.slane %v245, 7
    %v267 = vsel %vm158, %v266, %v243
    %v268 = vrot.slane %v247, 6
    %v269 = vsel %vm160, %v268, %v267
    %v270 = vrot.slane %v249, 5
    %v271 = vsel %vm162, %v270, %v269
    %v272 = vrot.slane %v251, 4
    %v273 = vsel %vm164, %v272, %v271
    %v274 = vrot.slane %v253, 3
    %v275 = vsel %vm166, %v274, %v273
    %v276 = vrot.slane %v255, 2
    %v277 = vsel %vm168, %v276, %v275
    %v278 = vrot.slane %v257, 1
    %v279 = vsel %vm170, %v278, %v277
    %v280 = vsel %vm67, %v279, 0
    %282 = vmatprep.subr.mxu0 0.0
    %283 = vmatpush1.msra.mxu0 %v63
    %284 = vmatprep.subr.mxu0 0.0
    %285 = vmatpush1.msra.mxu0 %v64
    %286 = vmatprep.subr.mxu0 0.0
    %287 = vmatpush1.msra.mxu0 %v65
    %288 = vmatprep.subr.mxu0 0.0
    %289 = vmatpush1.msra.mxu0 %v66
    %290 = vmatprep.subr.mxu0 0.0
    %291 = vmatpush1.msra.mxu0 0.0
    %292 = vmatprep.subr.mxu0 0.0
    %293 = vmatpush1.msra.mxu0 0.0
    %294 = vmatprep.subr.mxu0 0.0
    %295 = vmatpush1.msra.mxu0 0.0
    %296 = vmatprep.subr.mxu0 0.0
    %297 = vmatpush1.msra.mxu0 0.0
    %298 = vmatprep.subr.mxu0 0.0
    %299 = vmatpush1.msra.mxu0 0.0
    %300 = vmatprep.subr.mxu0 0.0
    %301 = vmatpush1.msra.mxu0 0.0
    %302 = vmatprep.subr.mxu0 0.0
    %303 = vmatpush1.msra.mxu0 0.0
    %304 = vmatprep.subr.mxu0 0.0
    %305 = vmatpush1.msra.mxu0 0.0
    %306 = vmatprep.subr.mxu0 0.0
    %307 = vmatpush1.msra.mxu0 0.0
    %308 = vmatprep.subr.mxu0 0.0
    %309 = vmatpush1.msra.mxu0 0.0
    %310 = vmatprep.subr.mxu0 0.0
    %311 = vmatpush1.msra.mxu0 0.0
    %312 = vmatprep.subr.mxu0 0.0
    %313 = vmatpush1.msra.mxu0 0.0
    %314 = vmatprep.subr.mxu0 0.0
    %315 = vmatpush1.msra.mxu0 0.0
    %316 = vmatprep.subr.mxu0 0.0
    %317 = vmatpush1.msra.mxu0 0.0
    %318 = vmatprep.subr.mxu0 0.0
    %319 = vmatpush1.msra.mxu0 0.0
    %320 = vmatprep.subr.mxu0 0.0
    %321 = vmatpush1.msra.mxu0 0.0
    %322 = vmatprep.subr.mxu0 0.0
    %323 = vmatpush1.msra.mxu0 0.0
    %324 = vmatprep.subr.mxu0 0.0
    %325 = vmatpush1.msra.mxu0 0.0
    %326 = vmatprep.subr.mxu0 0.0
    %327 = vmatpush1.msra.mxu0 0.0
    %328 = vmatprep.subr.mxu0 0.0
    %329 = vmatpush1.msra.mxu0 0.0
    %330 = vmatprep.subr.mxu0 0.0
    %331 = vmatpush1.msra.mxu0 0.0
    %332 = vmatprep.subr.mxu0 0.0
    %333 = vmatpush1.msra.mxu0 0.0
    %334 = vmatprep.subr.mxu0 0.0
    %335 = vmatpush1.msra.mxu0 0.0
    %336 = vmatprep.subr.mxu0 0.0
    %337 = vmatpush1.msra.mxu0 0.0
    %338 = vmatprep.subr.mxu0 0.0
    %339 = vmatpush1.msra.mxu0 0.0
    %340 = vmatprep.subr.mxu0 0.0
    %341 = vmatpush1.msra.mxu0 0.0
    %342 = vmatprep.subr.mxu0 0.0
    %343 = vmatpush1.msra.mxu0 0.0
    %344 = vmatprep.subr.mxu0 0.0
    %345 = vmatpush1.msra.mxu0 0.0
    %346 = vmatprep.mubr.f32.mxu0 0.0
    %347 = vmatmul.mubr.f32.gmra.mrb[0].mxu0 %v280
    %v348 = vpop.f32.mrb[0].mxu0
    %v349 = vadd.f32 0.0, %v348
    %v350 = vpop.f32.mrb[0].mxu0
    %351 = vdwg.mxu0
    %v352 = vmul.f32 %v54, 0.5
    %v353 = vmul.f32 %v349, 0.5
    %v354 = vadd.f32 %v352, %v353
    %355 = vst.msk [vmem:[#allocation8] sm:$0xff] %vm67, %v354
    // Predicated region
    $region26: #{tpu_custom_call.1} parent=1 // pred_check
      _
    $region27: #{tpu_custom_call.1} parent=1 // pred_check_branch
      %357 = sbr.rel (0) target = $region29
    $region28: #{tpu_custom_call.1} parent=1 // pred_region
      %s359 = ssub.s32 128, 128
      %360 = vsyncadd [#allocation4], %s359
      %s362 = sshll.u32 [#allocation8], 4
      %s363 = int_to_ptr.vmem [resolvable:$true] %s362
      %365 = dma.vmem_to_hbm [thread:$0]  %s363, 128, %s3, [#allocation4]
    $region29: #{tpu_custom_call.1} parent=1 // pred_fallthru
      _
    // Predicated region
    $region30: #{tpu_custom_call.1} parent=1 // pred_check
      _
    $region31: #{tpu_custom_call.1} parent=1 // pred_check_branch
      %367 = sbr.rel (0) target = $region33
    $region32: #{tpu_custom_call.1} parent=1 // pred_region
      %368 = dma.done [#allocation4], 128
    $region33: #{tpu_custom_call.1} parent=1 // pred_fallthru
      _
    %369 = vsyncpa [#allocation3], 1
    %370 = vsyncpa [#allocation6], 1
    %371 = vsyncpa [#allocation4], 1

</llo_original>
